<compile_context>
chip_gen: v6e
topology: v6e:2x2x1
jax: 0.10.0
libtpu: 0.0.40
codegen_flags: <defaults>
</compile_context>

<pallas_src>
import numpy as np
import jax
import jax.numpy as jnp
from jax import lax
from jax.experimental import pallas as pl
from jax.experimental.pallas import tpu as pltpu


def _round_up(n, m):
    return ((n + m - 1) // m) * m


# 32 MiB: >= kernel needs here, raises v5e's 16 MiB scoped default, <= v6e/v7x defaults.
_VMEM_LIMIT = 32 * 1024 * 1024


# ----------------------------------------------------------------------------
# Kernel 1a: statement feature projection  H = X @ W  (bf16 out for kernel 1b)
# ----------------------------------------------------------------------------
def gnn_project_kernel(x_ref, w_ref, h_ref):
    h_ref[...] = jnp.dot(x_ref[...], w_ref[...],
                         preferred_element_type=jnp.float32).astype(jnp.bfloat16)


# ----------------------------------------------------------------------------
# Kernel 1b: row-tiled SuperGAT-style attention
#   hq:  [TM, Dh]  query rows of H (this grid step)
#   hall:[S,  Dh]  all keys / values (resident, constant block index)
#   adj: [TM, S]   adjacency row block, int8 {0,1}
#   out: [TM, Dh]  relu(softmax_adj(q k^T / sqrt(d)) @ H)
# ----------------------------------------------------------------------------
def gnn_attention_kernel(hq_ref, hall_ref, adj_ref, out_ref):
    dh = hall_ref.shape[-1]
    scale = jnp.float32(1.0 / (float(dh) ** 0.5))
    # scale the small [TM, Dh] query block instead of the [TM, S] score matrix
    hq = (hq_ref[...].astype(jnp.float32) * scale).astype(jnp.bfloat16)
    # q @ H^T without materializing the transpose (contract dim 1 of both)
    scores = lax.dot_general(hq, hall_ref[...],
                             dimension_numbers=(((1,), (1,)), ((), ())),
                             preferred_element_type=jnp.float32)            # [TM, S]
    scores = jnp.where(adj_ref[...] > 0, scores, jnp.float32(-1e9))
    scores = scores - jnp.max(scores, axis=-1, keepdims=True)
    p = jnp.exp(scores)
    inv = pl.reciprocal(jnp.sum(p, axis=-1, keepdims=True), approx=True)
    alpha = (p * inv).astype(jnp.bfloat16)
    agg = jnp.dot(alpha, hall_ref[...], preferred_element_type=jnp.float32)  # [TM, Dh]
    out_ref[...] = jnp.maximum(agg, 0.0)                                     # ReLU


def gnn_encode(x_bf16, adj_i8, w_bf16, tm):
    S, Din = x_bf16.shape
    Dh = w_bf16.shape[1]

    h_all = pl.pallas_call(
        gnn_project_kernel,
        out_shape=jax.ShapeDtypeStruct((S, Dh), jnp.bfloat16),
        grid=(1,),
        in_specs=[pl.BlockSpec((S, Din), lambda i: (0, 0)),
                  pl.BlockSpec((Din, Dh), lambda i: (0, 0))],
        out_specs=pl.BlockSpec((S, Dh), lambda i: (0, 0)),
        compiler_params=pltpu.CompilerParams(
            dimension_semantics=("arbitrary",), vmem_limit_bytes=_VMEM_LIMIT),
    )(x_bf16, w_bf16)

    out = pl.pallas_call(
        gnn_attention_kernel,
        out_shape=jax.ShapeDtypeStruct((S, Dh), jnp.float32),
        grid=(S // tm,),
        in_specs=[
            pl.BlockSpec((tm, Dh), lambda i: (i, 0)),    # query row block of H
            pl.BlockSpec((S, Dh), lambda i: (0, 0)),     # all keys/values (stays resident)
            pl.BlockSpec((tm, S), lambda i: (i, 0)),     # adjacency row block (int8)
        ],
        out_specs=pl.BlockSpec((tm, Dh), lambda i: (i, 0)),
        compiler_params=pltpu.CompilerParams(
            dimension_semantics=("parallel",), vmem_limit_bytes=_VMEM_LIMIT),
    )(h_all, h_all, adj_i8)
    return out


# ----------------------------------------------------------------------------
# Kernel 2: flow-tiled GRU + online attention pooling (FlowGRULayer)
#   grid over flow tiles (parallel); only time is serial inside a tile.
#   x:    [T, NF_tile, D]  time-major statement embeddings for this flow tile
#   lens: [NF_tile, 1]     per-flow lengths (0 for padded flows)
#   out:  [NF_tile, Op]    flow embeddings (ReLU), Op = 128-padded flow_hidden
#   attn: [NF_tile, T]     attention weights over statements (lane-dense)
#   Gate weights use 128-lane stripes: w_*[:, g*Hp : g*Hp+H], zeros elsewhere.
# ----------------------------------------------------------------------------
def flow_gru_kernel(x_ref, lens_ref,
                    w_ih_ref, w_hh_ref, b_i_ref, b_h_ref,
                    w_att_ref, b_att_ref, w_lin_ref, b_lin_ref,
                    out_ref, attn_ref,
                    xg_ref, sc_ref):
    T, NF, D = x_ref.shape
    Hp = w_hh_ref.shape[0]                       # 128-padded hidden / gate stripe
    H3 = w_hh_ref.shape[1]                       # 3*Hp, gate order r | z | n
    neg_big = jnp.float32(-1e9)

    # ---- hoisted input projection: one [T*NF, D] @ [D, 3Hp] matmul ----------
    # b_i already folds b_ir+b_hr | b_iz+b_hz | b_in.
    xg_ref[...] = (jnp.dot(x_ref[...].reshape(T * NF, D), w_ih_ref[...],
                           preferred_element_type=jnp.float32) + b_i_ref[...])

    w_hh = w_hh_ref[...]                         # [Hp, 3Hp]
    # hoisted broadcasts (JAX does not CSE broadcast_in_dim inside the unrolled loop)
    b_hb = pl.broadcast_to(b_h_ref[...], (NF, H3))      # 0 | 0 | b_hn
    w_att_b = pl.broadcast_to(w_att_ref[...], (NF, Hp))
    b_att_b = pl.broadcast_to(b_att_ref[...], (NF, 1))
    lens = lens_ref[...]                         # [NF, 1] int32

    def step(t, carry):
        h, m, l, acc = carry                                        # [NF,Hp],[NF,1],[NF,1],[NF,Hp]
        base = pl.multiple_of(t * NF, NF)
        gi = xg_ref[pl.ds(base, NF), :]                              # [NF, 3Hp]
        gh = jnp.dot(h, w_hh, preferred_element_type=jnp.float32) + b_hb
        # 128-lane-aligned gate slices (Hp is a multiple of 128)
        r = jax.nn.sigmoid(gi[:, 0:Hp] + gh[:, 0:Hp])
        z = jax.nn.sigmoid(gi[:, Hp:2 * Hp] + gh[:, Hp:2 * Hp])
        n = jnp.tanh(gi[:, 2 * Hp:H3] + r * gh[:, 2 * Hp:H3])
        h_new = (1.0 - z) * n + z * h
        valid = lens > t
        h_next = jnp.where(valid, h_new, h)      # freeze state past the flow length
        # ---- online (flash-style) softmax-over-time attention pooling ------
        s = jnp.sum(h_next * w_att_b, axis=-1, keepdims=True) + b_att_b   # [NF, 1]
        s = jnp.where(valid, s, neg_big)
        sc_ref[t] = s                            # record score for attn output
        m_new = jnp.maximum(m, s)
        alpha = jnp.exp(m - m_new)
        p = jnp.where(valid, jnp.exp(s - m_new), 0.0)
        return h_next, m_new, alpha * l + p, alpha * acc + p * h_next

    carry0 = (jnp.zeros((NF, Hp), jnp.float32),
              jnp.full((NF, 1), neg_big, jnp.float32),
              jnp.zeros((NF, 1), jnp.float32),
              jnp.zeros((NF, Hp), jnp.float32))
    _, m_f, l_f, acc_f = lax.fori_loop(0, T, step, carry0, unroll=min(T, 8))

    inv_l = pl.reciprocal(jnp.maximum(l_f, 1e-9), approx=True)   # zero-length guard
    pooled = acc_f * inv_l                                        # [NF, Hp]
    out = (jnp.dot(pooled, w_lin_ref[...], preferred_element_type=jnp.float32)
           + b_lin_ref[...])                                      # [NF, Op]
    out_ref[...] = jnp.maximum(out, 0.0)                          # activation = relu

    # ---- attention weights, emitted lane-dense as [NF, T] -------------------
    scores = sc_ref[...]                                          # [T, NF, 1]
    tvec = lax.broadcasted_iota(jnp.int32, (T, NF, 1), 0)
    attn3 = jnp.where(tvec < lens, jnp.exp(scores - m_f), 0.0) * inv_l   # [T, NF, 1]
    attn_ref[...] = jnp.transpose(attn3.reshape(T, NF), (1, 0))          # [NF, T]


def flow_gru(x_seq, lengths, params, tnf):
    """x_seq: [T, NF_pad, D] time-major; lengths: [NF_pad] int32; tnf divides NF_pad."""
    T, NFp, D = x_seq.shape
    Hp = params["w_hh_f"].shape[0]
    H3 = params["w_hh_f"].shape[1]
    Op = params["w_lin"].shape[1]
    lens_col = lengths.reshape(NFp, 1).astype(jnp.int32)

    const2 = lambda f: (0, 0)
    flow_emb, attn = pl.pallas_call(
        flow_gru_kernel,
        out_shape=(
            jax.ShapeDtypeStruct((NFp, Op), jnp.float32),   # flow embeddings (padded)
            jax.ShapeDtypeStruct((NFp, T), jnp.float32),    # attention weights
        ),
        grid=(NFp // tnf,),
        in_specs=[
            pl.BlockSpec((T, tnf, D), lambda f: (0, f, 0)),  # x (time-major, flow tile)
            pl.BlockSpec((tnf, 1), lambda f: (f, 0)),        # lengths
            pl.BlockSpec((D, H3), const2),                   # w_ih fused r|z|n (128 stripes)
            pl.BlockSpec((Hp, H3), const2),                  # w_hh fused r|z|n
            pl.BlockSpec((1, H3), const2),                   # b_i fused
            pl.BlockSpec((1, H3), const2),                   # b_h fused (0|0|b_hn)
            pl.BlockSpec((1, Hp), const2),                   # w_att
            pl.BlockSpec((1, 1), const2),                    # b_att
            pl.BlockSpec((Hp, Op), const2),                  # w_lin
            pl.BlockSpec((1, Op), const2),                   # b_lin
        ],
        out_specs=[
            pl.BlockSpec((tnf, Op), lambda f: (f, 0)),
            pl.BlockSpec((tnf, T), lambda f: (f, 0)),
        ],
        scratch_shapes=[
            pltpu.VMEM((T * tnf, H3), jnp.float32),   # hoisted input gates
            pltpu.VMEM((T, tnf, 1), jnp.float32),     # per-step attention scores
        ],
        compiler_params=pltpu.CompilerParams(
            dimension_semantics=("parallel",), vmem_limit_bytes=_VMEM_LIMIT),
    )(x_seq, lens_col,
      params["w_ih_f"], params["w_hh_f"], params["b_i_f"], params["b_h_f"],
      params["w_att"], params["b_att"], params["w_lin"], params["b_lin"])
    return flow_emb, attn


# ----------------------------------------------------------------------------
# FlowGNNEncoder wrapper (glue: embedding gather, padding, flow packing)
# ----------------------------------------------------------------------------
class FlowGNNEncoderPallas:
    def __init__(self, vocab_size, emb_dim, hidden_dim, flow_hidden, pad_idx, key):
        self.pad_idx = pad_idx
        self.hidden_dim = hidden_dim
        self.flow_hidden = flow_hidden
        k = jax.random.split(key, 10)
        s = 0.1
        emb = jax.random.normal(k[0], (vocab_size, emb_dim), jnp.float32) * s
        self.emb_table = emb.at[pad_idx].set(0.0)
        self.w_gnn = jax.random.normal(k[1], (emb_dim, hidden_dim), jnp.float32) * s

        H, D = flow_hidden, hidden_dim
        Hp = _round_up(H, 128)            # 128-lane gate stripes / padded hidden
        Op = Hp                           # 128-padded output (cropped in wrapper)
        w_ih = jax.random.normal(k[2], (3, D, H), jnp.float32) * s   # r, z, n
        w_hh = jax.random.normal(k[3], (3, H, H), jnp.float32) * s
        b_ih = jax.random.normal(k[4], (3, H), jnp.float32) * s
        b_hh = jax.random.normal(k[5], (3, H), jnp.float32) * s
        w_att = jax.random.normal(k[6], (1, H), jnp.float32) * s
        w_lin = jax.random.normal(k[7], (H, H), jnp.float32) * s

        w_ih_f = jnp.zeros((D, 3 * Hp), jnp.float32)
        w_hh_f = jnp.zeros((Hp, 3 * Hp), jnp.float32)
        for g in range(3):                               # lane-aligned gate stripes
            w_ih_f = w_ih_f.at[:, g * Hp:g * Hp + H].set(w_ih[g])
            w_hh_f = w_hh_f.at[:H, g * Hp:g * Hp + H].set(w_hh[g])
        # constant biases pre-folded out of the recurrence (only b_hn stays on the
        # hidden side because it is multiplied by r)
        b_i_f = jnp.zeros((1, 3 * Hp), jnp.float32)
        b_i_f = b_i_f.at[0, 0 * Hp:0 * Hp + H].set(b_ih[0] + b_hh[0])
        b_i_f = b_i_f.at[0, 1 * Hp:1 * Hp + H].set(b_ih[1] + b_hh[1])
        b_i_f = b_i_f.at[0, 2 * Hp:2 * Hp + H].set(b_ih[2])
        b_h_f = jnp.zeros((1, 3 * Hp), jnp.float32)
        b_h_f = b_h_f.at[0, 2 * Hp:2 * Hp + H].set(b_hh[2])

        self.gru_params = {
            "w_ih_f": w_ih_f, "w_hh_f": w_hh_f, "b_i_f": b_i_f, "b_h_f": b_h_f,
            "w_att": jnp.zeros((1, Hp), jnp.float32).at[:, :H].set(w_att),
            "b_att": jnp.zeros((1, 1), jnp.float32),
            "w_lin": jnp.zeros((Hp, Op), jnp.float32).at[:H, :H].set(w_lin),
            "b_lin": jnp.zeros((1, Op), jnp.float32),
        }
        self._attn = None

    def __call__(self, tokens, adj, statements_per_label):
        # --- statement features: mean of non-pad token embeddings (glue) -----
        tok_emb = jnp.take(self.emb_table, tokens, axis=0)                   # [S, L, E]
        tok_mask = (tokens != self.pad_idx).astype(jnp.float32)[..., None]   # [S, L, 1]
        denom = jnp.clip(jnp.sum(tok_mask, axis=1), 1.0, None)               # [S, 1]
        x = jnp.sum(tok_emb * tok_mask, axis=1) / denom                      # [S, E]

        # --- kernel 1: row-tiled graph attention -> statement embeddings -----
        S = x.shape[0]
        S8 = _round_up(S, 8)
        tm = min(S8, 256)                                 # query-row tile
        S_pad = _round_up(S8, tm)
        x_p = jnp.zeros((S_pad, x.shape[1]), jnp.bfloat16).at[:S].set(
            x.astype(jnp.bfloat16))
        adj_p = jnp.zeros((S_pad, S_pad), jnp.int8).at[:S, :S].set(
            (jnp.asarray(adj) > 0).astype(jnp.int8))
        stmt_emb = gnn_encode(x_p, adj_p, self.w_gnn.astype(jnp.bfloat16), tm)[:S]

        # --- pack statements into a padded time-major flow batch (one gather) -
        spl = np.asarray(statements_per_label).astype(np.int64)
        n_flow = int(spl.shape[0])
        T = int(spl.max())
        T_pad = _round_up(T, 8)
        tnf = min(_round_up(n_flow, 8), 128)              # flows per grid tile
        NF_pad = _round_up(n_flow, tnf)
        offsets = np.concatenate([[0], np.cumsum(spl)])
        idx = np.full((T_pad, NF_pad), S, dtype=np.int32)  # sentinel -> zero row
        for f in range(n_flow):                            # host-side numpy only
            l = int(spl[f])
            idx[:l, f] = offsets[f] + np.arange(l, dtype=np.int64)
        stmt_ext = jnp.concatenate(
            [stmt_emb, jnp.zeros((1, self.hidden_dim), jnp.float32)], axis=0)
        x_seq = jnp.take(stmt_ext, jnp.asarray(idx.reshape(-1)), axis=0
                         ).reshape(T_pad, NF_pad, self.hidden_dim)
        lengths = np.zeros((NF_pad,), np.int32)
        lengths[:n_flow] = spl
        lengths = jnp.asarray(lengths)

        # --- kernel 2: flow-tiled GRU + online attention pooling --------------
        flow_emb, attn = flow_gru(x_seq, lengths, self.gru_params, tnf)
        self._attn = attn[:n_flow, :T]                    # [n_flow, max n_statements]
        return flow_emb[:n_flow, :self.flow_hidden]       # [n_flow, flow_hidden]

    def get_flow_attention_weights(self):
        # already squeezed: [n_flow, max flow n_statements]
        return (self._attn, None)


# ----------------------------------------------------------------------------
if __name__ == "__main__":
    key = jax.random.PRNGKey(0)
    k_tok, k_params = jax.random.split(key)

    # synthetic config: vocab=50, emb=32, ast.hidden_dim=32, flow_hidden_size=32
    vocab_size, emb_dim, hidden_dim, flow_hidden, pad_idx = 50, 32, 32, 32, 0
    statements_per_label = np.array([4, 2, 3], dtype=np.int32)   # n_flow=3, total S=9
    S = int(statements_per_label.sum())
    L = 6                                                         # tokens per statement

    tokens = jax.random.randint(k_tok, (S, L), 1, vocab_size, dtype=jnp.int32)
    tokens = tokens.at[:, L - 2:].set(pad_idx)                    # deterministic padding

    # value-flow adjacency: chain within each flow + self loops
    adj_np = np.eye(S, dtype=np.float32)
    off = 0
    for l in statements_per_label:
        for i in range(int(l) - 1):
            adj_np[off + i, off + i + 1] = 1.0
            adj_np[off + i + 1, off + i] = 1.0
        off += int(l)
    adj = jnp.asarray(adj_np)

    model = FlowGNNEncoderPallas(vocab_size, emb_dim, hidden_dim, flow_hidden,
                                 pad_idx, k_params)
    flow_emb = model(tokens, adj, statements_per_label)
    jax.block_until_ready(flow_emb)
    attn_w, _ = model.get_flow_attention_weights()
    jax.block_until_ready(attn_w)

    assert flow_emb.shape == (statements_per_label.shape[0], flow_hidden)
    assert attn_w.shape == (statements_per_label.shape[0],
                            int(statements_per_label.max()))
    assert bool(jnp.all(jnp.isfinite(flow_emb))) and bool(jnp.all(jnp.isfinite(attn_w)))
    # attention rows are (approximately) normalized over each flow's valid steps
    row_sums = np.asarray(jnp.sum(attn_w, axis=1))
    assert np.all(np.abs(row_sums - 1.0) < 5e-2)
    print("KERNEL_OK")
</pallas_src>

<mosaic_0001>
module attributes {stable_mosaic.version = 11 : i64} {
  func.func @gnn_project_kernel(%arg0: i32, %arg1: memref<16x32xbf16, #tpu.memory_space<vmem>>, %arg2: memref<32x32xbf16, #tpu.memory_space<vmem>>, %arg3: memref<16x32xbf16, #tpu.memory_space<vmem>>) attributes {dimension_semantics = [#tpu.dimension_semantics<arbitrary>], iteration_bounds = array<i64: 1>, scalar_prefetch = 0 : i64, scratch_operands = 0 : i64, tpu.core_type = #tpu.core_type<tc>, window_params = [{pipeline_mode = #tpu.pipeline_mode<synchronous>, transform_indices = @transform_0, window_bounds = array<i64: 16, 32>}, {pipeline_mode = #tpu.pipeline_mode<synchronous>, transform_indices = @transform_1, window_bounds = array<i64: 32, 32>}, {pipeline_mode = #tpu.pipeline_mode<synchronous>, transform_indices = @transform_2, window_bounds = array<i64: 16, 32>}]} {
    %c0 = arith.constant 0 : index
    %c0_0 = arith.constant 0 : index
    %0 = vector.load %arg1[%c0, %c0_0] : memref<16x32xbf16, #tpu.memory_space<vmem>>, vector<16x32xbf16>
    %c0_1 = arith.constant 0 : index
    %c0_2 = arith.constant 0 : index
    %1 = vector.load %arg2[%c0_1, %c0_2] : memref<32x32xbf16, #tpu.memory_space<vmem>>, vector<32x32xbf16>
    %cst = arith.constant dense<0.000000e+00> : vector<16x32xf32>
    %2 = tpu.matmul %0, %1, %cst {dimension_numbers = #tpu.dot_dimension_numbers<[1], [0], [0], [1], [0, 0, 1, 1], [], []>} : vector<16x32xbf16>, vector<32x32xbf16>, vector<16x32xf32> -> vector<16x32xf32>
    %3 = arith.truncf %2 : vector<16x32xf32> to vector<16x32xbf16>
    %c0_3 = arith.constant 0 : index
    %c0_4 = arith.constant 0 : index
    %4 = vector.load %arg3[%c0_3, %c0_4] : memref<16x32xbf16, #tpu.memory_space<vmem>>, vector<16x32xbf16>
    tpu.vector_store %arg3[%c0_3, %c0_4], %3 {strides = array<i32>} : memref<16x32xbf16, #tpu.memory_space<vmem>>, vector<16x32xbf16>,
    return
  }
  func.func @transform_0(%arg0: i32) -> (i32, i32) {
    %c0_i32 = arith.constant 0 : i32
    %c0_i32_0 = arith.constant 0 : i32
    %c0_i32_1 = arith.constant 0 : i32
    return %c0_i32, %c0_i32_0 : i32, i32
  }
  func.func @transform_1(%arg0: i32) -> (i32, i32) {
    %c0_i32 = arith.constant 0 : i32
    %c0_i32_0 = arith.constant 0 : i32
    %c0_i32_1 = arith.constant 0 : i32
    return %c0_i32, %c0_i32_0 : i32, i32
  }
  func.func @transform_2(%arg0: i32) -> (i32, i32) {
    %c0_i32 = arith.constant 0 : i32
    %c0_i32_0 = arith.constant 0 : i32
    %c0_i32_1 = arith.constant 0 : i32
    return %c0_i32, %c0_i32_0 : i32, i32
  }
}

</mosaic_0001>

<llo_original>
// kernel: tpu_custom_call.1
$region0: #{tpu_custom_call.1}
  #allocation0 [shape = 'u32[]', space=smem, size = 0x4, offset = 0x4, fixed_abs, tag = 'smem constant byte address 0x4 - core index']
  #allocation1 [shape = 'u32[144,128]{1,0:T(1,128)}', space=vmem, size = 0x12000, scoped, tag = 'internal scratch']
  %s0 = inlined_call_operand.hbm [shape: bf16[16,32], index: 0, kind: input, shape index: {}]
  %s1 = inlined_call_operand.hbm [shape: bf16[32,32], index: 1, kind: input, shape index: {}]
  %s2 = inlined_call_operand.hbm [shape: bf16[16,32], index: 2, kind: output, shape index: {}]
  %s3 = sld [smem:[#allocation0]]
  $region26: #{tpu_custom_call.1} parent=0
    _
  %s5 = ssub.s32 1, %s3
  %s6 = scalar_select 0, %s5, %s3
  $region1: #{tpu_custom_call.1} parent=0
    #allocation2 [shape = 'u8[4096]{0}', space=vmem, size = 0x1000, scoped, tag = 'input window, operand 0, single buffered']
    #allocation3 [shape = 's32[1]{0}', space=sflag, size = 0x4, scoped, tag = 'scoped memory for tpu_custom_call.1']
    #allocation4 [shape = 's32[1]{0}', space=sflag, size = 0x4, scoped, tag = 'scoped memory for tpu_custom_call.1']
    #allocation5 [shape = 'u8[8192]{0}', space=vmem, size = 0x2000, scoped, tag = 'input window, operand 1, single buffered']
    #allocation6 [shape = 's32[1]{0}', space=sflag, size = 0x4, scoped, tag = 'scoped memory for tpu_custom_call.1']
    #allocation7 [shape = 'u8[4096]{0}', space=vmem, size = 0x1000, scoped, tag = 'output window, operand 0, single buffered']
    %7 = vsyncpa [#allocation3], 0
    %8 = vsyncpa [#allocation6], 0
    %9 = vsyncpa [#allocation4], 0
    // Predicated region
    $region2: #{tpu_custom_call.1} parent=1 // pred_check
      _
    $region3: #{tpu_custom_call.1} parent=1 // pred_check_branch
      %11 = sbr.rel (0) target = $region5
    $region4: #{tpu_custom_call.1} parent=1 // pred_region
      %s13 = ssub.s32 128, 128
      %14 = vsyncadd [#allocation3], %s13
      %s15 = sshll.u32 [#allocation2], 4
      %s16 = int_to_ptr.vmem [resolvable:$true] %s15
      %21 = dma.hbm_to_vmem [thread:$0]  %s0, 128, %s16, [#allocation3], 64, 64, 4
    $region5: #{tpu_custom_call.1} parent=1 // pred_fallthru
      _
    // Predicated region
    $region6: #{tpu_custom_call.1} parent=1 // pred_check
      _
    $region7: #{tpu_custom_call.1} parent=1 // pred_check_branch
      %23 = sbr.rel (0) target = $region9
    $region8: #{tpu_custom_call.1} parent=1 // pred_region
      %s25 = ssub.s32 256, 256
      %26 = vsyncadd [#allocation6], %s25
      %s27 = sshll.u32 [#allocation5], 4
      %s28 = int_to_ptr.vmem [resolvable:$true] %s27
      %33 = dma.hbm_to_vmem [thread:$0]  %s1, 256, %s28, [#allocation6], 64, 64, 4
    $region9: #{tpu_custom_call.1} parent=1 // pred_fallthru
      _
    // Predicated region
    $region10: #{tpu_custom_call.1} parent=1 // pred_check
      _
    $region11: #{tpu_custom_call.1} parent=1 // pred_check_branch
      %35 = sbr.rel (0) target = $region13
    $region12: #{tpu_custom_call.1} parent=1 // pred_region
      %36 = dma.done [#allocation3], 128
    $region13: #{tpu_custom_call.1} parent=1 // pred_fallthru
      _
    // Predicated region
    $region14: #{tpu_custom_call.1} parent=1 // pred_check
      _
    $region15: #{tpu_custom_call.1} parent=1 // pred_check_branch
      %38 = sbr.rel (0) target = $region17
    $region16: #{tpu_custom_call.1} parent=1 // pred_region
      %39 = dma.done [#allocation6], 256
    $region17: #{tpu_custom_call.1} parent=1 // pred_fallthru
      _
    %v41 = vld [vmem:[#allocation2] sm:$0xf]
    %v42 = vld [vmem:[#allocation2 + $0x4] sm:$0xf]
    %v43 = vld [vmem:[#allocation5] sm:$0xf]
    %v44 = vld [vmem:[#allocation5 + $0x4] sm:$0xf]
    %v45 = vld [vmem:[#allocation5 + $0x8] sm:$0xf]
    %v46 = vld [vmem:[#allocation5 + $0xc] sm:$0xf]
    %v49 = vunpack.c.l.b16 %v41
    %v50 = vunpack.c.l.b16 %v42
    %v51 = vpack.c.b16 %v50, %v49
    %v56 = vunpack.c.l.b16 %v43
    %v57 = vunpack.c.l.b16 %v44
    %v58 = vunpack.c.l.b16 %v45
    %v59 = vunpack.c.l.b16 %v46
    %v60 = vpack.c.b16 %v57, %v56
    %v61 = vpack.c.b16 %v59, %v58
    %vm64 = vcmask 261120
    %v66 = vsel %vm64, %v51, 0
    %68 = vmatprep.subr.bf16.mxu0 0
    %69 = vmatpush1.bf16.msra.mxu0 0
    %70 = vmatprep.subr.bf16.mxu0 0
    %71 = vmatpush1.bf16.msra.mxu0 0
    %72 = vmatprep.subr.bf16.mxu0 0
    %73 = vmatpush1.bf16.msra.mxu0 0
    %74 = vmatprep.subr.bf16.mxu0 0
    %75 = vmatpush1.bf16.msra.mxu0 0
    %76 = vmatprep.subr.bf16.mxu0 0
    %77 = vmatpush1.bf16.msra.mxu0 0
    %78 = vmatprep.subr.bf16.mxu0 0
    %79 = vmatpush1.bf16.msra.mxu0 0
    %80 = vmatprep.subr.bf16.mxu0 0
    %81 = vmatpush1.bf16.msra.mxu0 %v61
    %82 = vmatprep.subr.bf16.mxu0 0
    %83 = vmatpush1.bf16.msra.mxu0 %v60
    %84 = vmatprep.subr.bf16.mxu0 0
    %85 = vmatpush2.bf16.msra.mxu0 0
    %86 = vmatprep.subr.bf16.mxu0 0
    %87 = vmatpush2.bf16.msra.mxu0 0
    %88 = vmatprep.subr.bf16.mxu0 0
    %89 = vmatpush2.bf16.msra.mxu0 0
    %90 = vmatprep.subr.bf16.mxu0 0
    %91 = vmatpush2.bf16.msra.mxu0 0
    %92 = vmatprep.subr.bf16.mxu0 0
    %93 = vmatpush2.bf16.msra.mxu0 0
    %94 = vmatprep.subr.bf16.mxu0 0
    %95 = vmatpush2.bf16.msra.mxu0 0
    %96 = vmatprep.subr.bf16.mxu0 0
    %97 = vmatpush2.bf16.msra.mxu0 0
    %98 = vmatprep.subr.bf16.mxu0 0
    %99 = vmatpush2.bf16.msra.mxu0 0
    %100 = vmatprep.mubr.bf16.mxu0 0
    %101 = vmatmul.mubr.bf16.gmra.mxu0 %v66
    %v102 = vpop.f32.mrf.mxu0
    %v103 = vadd.f32 0.0, %v102
    %v104 = vpop.f32.mrf.mxu0
    %v105 = vpop.f32.mrf.mxu0
    %v106 = vadd.f32 0.0, %v105
    %v107 = vpop.f32.mrf.mxu0
    %108 = vdwg.mxu0
    %v109 = vpack.c.bf16 %v106, %v103
    %v111 = vunpack.c.l.b16 %v109
    %v112 = vunpack.c.h.b16 %v109
    %v113 = vpack.c.b16 %v111, %v111
    %v114 = vpack.c.b16 %v112, %v112
    %vm117 = vcmask 257024
    %118 = vst.msk [vmem:[#allocation7] sm:$0xf] %vm117, %v113
    %119 = vst.msk [vmem:[#allocation7 + $0x4] sm:$0xf] %vm117, %v114
    // Predicated region
    $region18: #{tpu_custom_call.1} parent=1 // pred_check
      _
    $region19: #{tpu_custom_call.1} parent=1 // pred_check_branch
      %121 = sbr.rel (0) target = $region21
    $region20: #{tpu_custom_call.1} parent=1 // pred_region
      %s123 = ssub.s32 128, 128
      %124 = vsyncadd [#allocation4], %s123
      %s125 = sshll.u32 [#allocation7], 4
      %s126 = int_to_ptr.vmem [resolvable:$true] %s125
      %131 = dma.vmem_to_hbm [thread:$0]  %s126, 128, %s2, [#allocation4], 64, 64, 4
    $region21: #{tpu_custom_call.1} parent=1 // pred_fallthru
      _
    // Predicated region
    $region22: #{tpu_custom_call.1} parent=1 // pred_check
      _
    $region23: #{tpu_custom_call.1} parent=1 // pred_check_branch
      %133 = sbr.rel (0) target = $region25
    $region24: #{tpu_custom_call.1} parent=1 // pred_region
      %134 = dma.done [#allocation4], 128
    $region25: #{tpu_custom_call.1} parent=1 // pred_fallthru
      _
    %135 = vsyncpa [#allocation3], 1
    %136 = vsyncpa [#allocation6], 1
    %137 = vsyncpa [#allocation4], 1

</llo_original>
